<compile_context>
chip_gen: v7x
topology: tpu7x:2x2x1
jax: 0.10.0
libtpu: 0.0.40
codegen_flags: <defaults>
</compile_context>

<pallas_src>
import jax
import jax.numpy as jnp
from jax.experimental import pallas as pl
from jax.experimental.pallas import tpu as pltpu


def _round_up(n, m):
    return ((n + m - 1) // m) * m


def _mlp_kernel(x_ref, w1_ref, b1_ref, w2_ref, b2_ref, w3_ref, b3_ref,
                w4_ref, b4_ref, o_ref):
    x = x_ref[...]                                               # (D_in, tb) bf16

    # Layer 1: Linear(D_in, 128) + ReLU   (Dropout -> identity in eval)
    h = jnp.dot(w1_ref[...], x, preferred_element_type=jnp.float32)     # (128, tb) f32
    h = jnp.maximum(h + b1_ref[...], 0.0).astype(jnp.bfloat16)

    # Layer 2: Linear(128, 64) + ReLU     (Dropout -> identity in eval)
    h = jnp.dot(w2_ref[...], h, preferred_element_type=jnp.float32)     # (64, tb)
    h = jnp.maximum(h + b2_ref[...], 0.0).astype(jnp.bfloat16)

    # Layer 3: Linear(64, 32) + ReLU
    h = jnp.dot(w3_ref[...], h, preferred_element_type=jnp.float32)     # (32, tb)
    h = jnp.maximum(h + b3_ref[...], 0.0).astype(jnp.bfloat16)

    # Layer 4: Linear(32, 1) -> (1,32)x(32,tb) = lane-dense (1, tb) row.
    out = jnp.dot(w4_ref[...], h, preferred_element_type=jnp.float32) + b4_ref[...]
    o_ref[0] = out.astype(o_ref.dtype)                           # (1, tb) full-width store


def regression_nn_forward(x, params, *, tb=None):
    """Fused forward pass. x: (B, D_in) float32 -> (B, 1) float32."""
    w1, b1, w2, b2, w3, b3, w4, b4 = params
    B, D_in = x.shape

    # Batch tile: big enough to hide per-grid-step overhead, multiple of 128
    # (lanes), capped so large batches still produce >= 2 tiles (v7x megacore).
    if tb is None:
        tb = min(4096, max(128, _round_up(pl.cdiv(B, 2), 128)))
    B_pad = _round_up(B, tb)
    num_tiles = B_pad // tb

    # Single fused pad + bf16 cast + transpose: (B, D_in) f32 -> (D_in, B_pad) bf16.
    # (The transpose is needed for the batch-on-lanes layout anyway, so the pad
    #  does not add a separate HBM pass.)
    x_t = jnp.pad(x, ((0, B_pad - B), (0, 0))).astype(jnp.bfloat16).T

    # bf16 matmul operands; f32 accumulation happens in-kernel. Biases stay f32.
    w1b, w2b, w3b, w4b = (w.astype(jnp.bfloat16) for w in (w1, w2, w3, w4))

    flops = 2 * B_pad * (D_in * 128 + 128 * 64 + 64 * 32 + 32 * 1)
    bytes_accessed = (x_t.size * 2 + B_pad * 4
                      + sum(w.size * 2 for w in (w1b, w2b, w3b, w4b))
                      + sum(b.size * 4 for b in (b1, b2, b3, b4)))

    def resident(arr):  # whole array stays in VMEM; block index never changes
        return pl.BlockSpec(arr.shape, lambda i: (0,) * arr.ndim)

    out3d = pl.pallas_call(
        _mlp_kernel,
        out_shape=jax.ShapeDtypeStruct((num_tiles, 1, tb), jnp.float32),
        grid_spec=pl.GridSpec(
            grid=(num_tiles,),
            in_specs=[
                pl.BlockSpec((D_in, tb), lambda i: (0, i)),      # streamed x tile
                resident(w1b), resident(b1),
                resident(w2b), resident(b2),
                resident(w3b), resident(b3),
                resident(w4b), resident(b4),
            ],
            out_specs=pl.BlockSpec((1, 1, tb), lambda i: (i, 0, 0)),  # lane-dense
        ),
        compiler_params=pltpu.CompilerParams(
            dimension_semantics=("parallel",)),
        cost_estimate=pl.CostEstimate(
            flops=flops, transcendentals=0, bytes_accessed=bytes_accessed),
    )(x_t, w1b, b1, w2b, b2, w3b, b3, w4b, b4)

    return out3d.reshape(B_pad)[:B].reshape(B, 1)


def init_params(key, input_dim):
    """Deterministic init. Weights stored feature-major [out, in]; biases [out, 1]."""
    dims = [(input_dim, 128), (128, 64), (64, 32), (32, 1)]
    params = []
    for i, (din, dout) in enumerate(dims):
        kw, kb = jax.random.split(jax.random.fold_in(key, i))
        bound = 1.0 / (din ** 0.5)       # PyTorch nn.Linear default uniform init
        w = jax.random.uniform(kw, (dout, din), jnp.float32, -bound, bound)
        b = jax.random.uniform(kb, (dout, 1), jnp.float32, -bound, bound)
        params += [w, b]
    return tuple(params)


def _reference(x, params):
    w1, b1, w2, b2, w3, b3, w4, b4 = params
    h = jnp.maximum(x @ w1.T + b1.T, 0.0)
    h = jnp.maximum(h @ w2.T + b2.T, 0.0)
    h = jnp.maximum(h @ w3.T + b3.T, 0.0)
    return h @ w4.T + b4.T


if __name__ == "__main__":
    key = jax.random.PRNGKey(0)
    input_dim = 32
    batch = 8

    kx, kp = jax.random.split(key)
    x = jax.random.normal(kx, (batch, input_dim), jnp.float32)
    params = init_params(kp, input_dim)

    out = regression_nn_forward(x, params)
    out = jax.block_until_ready(out)

    ref = _reference(x, params)
    assert out.shape == (batch, 1)
    # bf16 matmul operands -> loosened tolerance vs. the f32 reference.
    assert jnp.allclose(out, ref, atol=5e-2, rtol=5e-2), "mismatch vs reference"

    print("KERNEL_OK")
</pallas_src>

<mosaic_0001>
module attributes {stable_mosaic.version = 11 : i64} {
  func.func @_mlp_kernel(%arg0: i32, %arg1: memref<32x128xbf16, #tpu.memory_space<vmem>>, %arg2: memref<128x32xbf16, #tpu.memory_space<vmem>>, %arg3: memref<128x1xf32, #tpu.memory_space<vmem>>, %arg4: memref<64x128xbf16, #tpu.memory_space<vmem>>, %arg5: memref<64x1xf32, #tpu.memory_space<vmem>>, %arg6: memref<32x64xbf16, #tpu.memory_space<vmem>>, %arg7: memref<32x1xf32, #tpu.memory_space<vmem>>, %arg8: memref<1x32xbf16, #tpu.memory_space<vmem>>, %arg9: memref<1x1xf32, #tpu.memory_space<vmem>>, %arg10: memref<1x1x128xf32, #tpu.memory_space<vmem>>) attributes {dimension_semantics = [#tpu.dimension_semantics<parallel>], iteration_bounds = array<i64: 1>, scalar_prefetch = 0 : i64, scratch_operands = 0 : i64, tpu.core_type = #tpu.core_type<tc>, window_params = [{transform_indices = @transform_0, window_bounds = array<i64: 32, 128>}, {pipeline_mode = #tpu.pipeline_mode<synchronous>, transform_indices = @transform_1, window_bounds = array<i64: 128, 32>}, {pipeline_mode = #tpu.pipeline_mode<synchronous>, transform_indices = @transform_2, window_bounds = array<i64: 128, 1>}, {pipeline_mode = #tpu.pipeline_mode<synchronous>, transform_indices = @transform_3, window_bounds = array<i64: 64, 128>}, {pipeline_mode = #tpu.pipeline_mode<synchronous>, transform_indices = @transform_4, window_bounds = array<i64: 64, 1>}, {pipeline_mode = #tpu.pipeline_mode<synchronous>, transform_indices = @transform_5, window_bounds = array<i64: 32, 64>}, {pipeline_mode = #tpu.pipeline_mode<synchronous>, transform_indices = @transform_6, window_bounds = array<i64: 32, 1>}, {pipeline_mode = #tpu.pipeline_mode<synchronous>, transform_indices = @transform_7, window_bounds = array<i64: 1, 32>}, {pipeline_mode = #tpu.pipeline_mode<synchronous>, transform_indices = @transform_8, window_bounds = array<i64: 1, 1>}, {transform_indices = @transform_9, window_bounds = array<i64: 1, 1, 128>}]} {
    %c0 = arith.constant 0 : index
    %c0_0 = arith.constant 0 : index
    %0 = vector.load %arg1[%c0, %c0_0] : memref<32x128xbf16, #tpu.memory_space<vmem>>, vector<32x128xbf16>
    %c0_1 = arith.constant 0 : index
    %c0_2 = arith.constant 0 : index
    %1 = vector.load %arg2[%c0_1, %c0_2] : memref<128x32xbf16, #tpu.memory_space<vmem>>, vector<128x32xbf16>
    %cst = arith.constant dense<0.000000e+00> : vector<128x128xf32>
    %2 = tpu.matmul %1, %0, %cst {dimension_numbers = #tpu.dot_dimension_numbers<[1], [0], [0], [1], [0, 0, 1, 1], [], []>} : vector<128x32xbf16>, vector<32x128xbf16>, vector<128x128xf32> -> vector<128x128xf32>
    %c0_3 = arith.constant 0 : index
    %c0_4 = arith.constant 0 : index
    %3 = vector.load %arg3[%c0_3, %c0_4] : memref<128x1xf32, #tpu.memory_space<vmem>>, vector<128x1xf32>
    %4 = vector.broadcast %3 : vector<128x1xf32> to vector<128x128xf32>
    %5 = arith.addf %2, %4 : vector<128x128xf32>
    %cst_5 = arith.constant 0.000000e+00 : f32
    %6 = vector.broadcast %cst_5 : f32 to vector<128x128xf32>
    %7 = arith.maximumf %5, %6 : vector<128x128xf32>
    %8 = arith.truncf %7 : vector<128x128xf32> to vector<128x128xbf16>
    %c0_6 = arith.constant 0 : index
    %c0_7 = arith.constant 0 : index
    %9 = vector.load %arg4[%c0_6, %c0_7] : memref<64x128xbf16, #tpu.memory_space<vmem>>, vector<64x128xbf16>
    %cst_8 = arith.constant dense<0.000000e+00> : vector<64x128xf32>
    %10 = tpu.matmul %9, %8, %cst_8 {dimension_numbers = #tpu.dot_dimension_numbers<[1], [0], [0], [1], [0, 0, 1, 1], [], []>} : vector<64x128xbf16>, vector<128x128xbf16>, vector<64x128xf32> -> vector<64x128xf32>
    %c0_9 = arith.constant 0 : index
    %c0_10 = arith.constant 0 : index
    %11 = vector.load %arg5[%c0_9, %c0_10] : memref<64x1xf32, #tpu.memory_space<vmem>>, vector<64x1xf32>
    %12 = vector.broadcast %11 : vector<64x1xf32> to vector<64x128xf32>
    %13 = arith.addf %10, %12 : vector<64x128xf32>
    %cst_11 = arith.constant 0.000000e+00 : f32
    %14 = vector.broadcast %cst_11 : f32 to vector<64x128xf32>
    %15 = arith.maximumf %13, %14 : vector<64x128xf32>
    %16 = arith.truncf %15 : vector<64x128xf32> to vector<64x128xbf16>
    %c0_12 = arith.constant 0 : index
    %c0_13 = arith.constant 0 : index
    %17 = vector.load %arg6[%c0_12, %c0_13] : memref<32x64xbf16, #tpu.memory_space<vmem>>, vector<32x64xbf16>
    %cst_14 = arith.constant dense<0.000000e+00> : vector<32x128xf32>
    %18 = tpu.matmul %17, %16, %cst_14 {dimension_numbers = #tpu.dot_dimension_numbers<[1], [0], [0], [1], [0, 0, 1, 1], [], []>} : vector<32x64xbf16>, vector<64x128xbf16>, vector<32x128xf32> -> vector<32x128xf32>
    %c0_15 = arith.constant 0 : index
    %c0_16 = arith.constant 0 : index
    %19 = vector.load %arg7[%c0_15, %c0_16] : memref<32x1xf32, #tpu.memory_space<vmem>>, vector<32x1xf32>
    %20 = vector.broadcast %19 : vector<32x1xf32> to vector<32x128xf32>
    %21 = arith.addf %18, %20 : vector<32x128xf32>
    %cst_17 = arith.constant 0.000000e+00 : f32
    %22 = vector.broadcast %cst_17 : f32 to vector<32x128xf32>
    %23 = arith.maximumf %21, %22 : vector<32x128xf32>
    %24 = arith.truncf %23 : vector<32x128xf32> to vector<32x128xbf16>
    %c0_18 = arith.constant 0 : index
    %c0_19 = arith.constant 0 : index
    %25 = vector.load %arg8[%c0_18, %c0_19] : memref<1x32xbf16, #tpu.memory_space<vmem>>, vector<1x32xbf16>
    %cst_20 = arith.constant dense<0.000000e+00> : vector<1x128xf32>
    %26 = tpu.matmul %25, %24, %cst_20 {dimension_numbers = #tpu.dot_dimension_numbers<[1], [0], [0], [1], [0, 0, 1, 1], [], []>} : vector<1x32xbf16>, vector<32x128xbf16>, vector<1x128xf32> -> vector<1x128xf32>
    %c0_21 = arith.constant 0 : index
    %c0_22 = arith.constant 0 : index
    %27 = vector.load %arg9[%c0_21, %c0_22] : memref<1x1xf32, #tpu.memory_space<vmem>>, vector<1x1xf32>
    %28 = vector.broadcast %27 : vector<1x1xf32> to vector<1x128xf32>
    %29 = arith.addf %26, %28 : vector<1x128xf32>
    %c0_23 = arith.constant 0 : index
    %c0_24 = arith.constant 0 : index
    %c0_25 = arith.constant 0 : index
    %30 = vector.load %arg10[%c0_23, %c0_24, %c0_25] : memref<1x1x128xf32, #tpu.memory_space<vmem>>, vector<1x1x128xf32>
    %31 = vector.shape_cast %30 : vector<1x1x128xf32> to vector<1x128xf32>
    %32 = vector.shape_cast %29 : vector<1x128xf32> to vector<1x1x128xf32>
    tpu.vector_store %arg10[%c0_23, %c0_24, %c0_25], %32 {strides = array<i32>} : memref<1x1x128xf32, #tpu.memory_space<vmem>>, vector<1x1x128xf32>,
    return
  }
  func.func @transform_0(%arg0: i32) -> (i32, i32) {
    %c0_i32 = arith.constant 0 : i32
    %c0_i32_0 = arith.constant 0 : i32
    return %c0_i32, %arg0 : i32, i32
  }
  func.func @transform_1(%arg0: i32) -> (i32, i32) {
    %c0_i32 = arith.constant 0 : i32
    %c0_i32_0 = arith.constant 0 : i32
    %c0_i32_1 = arith.constant 0 : i32
    return %c0_i32, %c0_i32_0 : i32, i32
  }
  func.func @transform_2(%arg0: i32) -> (i32, i32) {
    %c0_i32 = arith.constant 0 : i32
    %c0_i32_0 = arith.constant 0 : i32
    %c0_i32_1 = arith.constant 0 : i32
    return %c0_i32, %c0_i32_0 : i32, i32
  }
  func.func @transform_3(%arg0: i32) -> (i32, i32) {
    %c0_i32 = arith.constant 0 : i32
    %c0_i32_0 = arith.constant 0 : i32
    %c0_i32_1 = arith.constant 0 : i32
    return %c0_i32, %c0_i32_0 : i32, i32
  }
  func.func @transform_4(%arg0: i32) -> (i32, i32) {
    %c0_i32 = arith.constant 0 : i32
    %c0_i32_0 = arith.constant 0 : i32
    %c0_i32_1 = arith.constant 0 : i32
    return %c0_i32, %c0_i32_0 : i32, i32
  }
  func.func @transform_5(%arg0: i32) -> (i32, i32) {
    %c0_i32 = arith.constant 0 : i32
    %c0_i32_0 = arith.constant 0 : i32
    %c0_i32_1 = arith.constant 0 : i32
    return %c0_i32, %c0_i32_0 : i32, i32
  }
  func.func @transform_6(%arg0: i32) -> (i32, i32) {
    %c0_i32 = arith.constant 0 : i32
    %c0_i32_0 = arith.constant 0 : i32
    %c0_i32_1 = arith.constant 0 : i32
    return %c0_i32, %c0_i32_0 : i32, i32
  }
  func.func @transform_7(%arg0: i32) -> (i32, i32) {
    %c0_i32 = arith.constant 0 : i32
    %c0_i32_0 = arith.constant 0 : i32
    %c0_i32_1 = arith.constant 0 : i32
    return %c0_i32, %c0_i32_0 : i32, i32
  }
  func.func @transform_8(%arg0: i32) -> (i32, i32) {
    %c0_i32 = arith.constant 0 : i32
    %c0_i32_0 = arith.constant 0 : i32
    %c0_i32_1 = arith.constant 0 : i32
    return %c0_i32, %c0_i32_0 : i32, i32
  }
  func.func @transform_9(%arg0: i32) -> (i32, i32, i32) {
    %c0_i32 = arith.constant 0 : i32
    %c0_i32_0 = arith.constant 0 : i32
    %c0_i32_1 = arith.constant 0 : i32
    return %arg0, %c0_i32, %c0_i32_0 : i32, i32, i32
  }
}

</mosaic_0001>

<llo_original>
// kernel: tpu_custom_call.1
$region0: #{tpu_custom_call.1}
  #allocation0 [shape = 'u32[]', space=smem, size = 0x4, offset = 0x4, fixed_abs, tag = 'smem constant byte address 0x4 - core index']
  #allocation1 [shape = 'u32[144,128]{1,0:T(1,128)}', space=vmem, size = 0x12000, scoped, tag = 'internal scratch']
  #allocation2 [shape = 'f32[1,1]{1,0:T(1,128)S(1)}', space=vmem, size = 0x200, scoped, tag = 'scoped memory for tpu_custom_call.1']
  %s0 = inlined_call_operand.vmem [shape: bf16[32,128], index: 0, kind: input, shape index: {}]
  %s1 = inlined_call_operand.vmem [shape: bf16[128,32], index: 1, kind: input, shape index: {}]
  %s2 = inlined_call_operand.vmem [shape: f32[128,1], index: 2, kind: input, shape index: {}]
  %s3 = inlined_call_operand.vmem [shape: bf16[64,128], index: 3, kind: input, shape index: {}]
  %s4 = inlined_call_operand.vmem [shape: f32[64,1], index: 4, kind: input, shape index: {}]
  %s5 = inlined_call_operand.vmem [shape: bf16[32,64], index: 5, kind: input, shape index: {}]
  %s6 = inlined_call_operand.vmem [shape: f32[32,1], index: 6, kind: input, shape index: {}]
  %s7 = inlined_call_operand.vmem [shape: bf16[1,32], index: 7, kind: input, shape index: {}]
  %s8 = inlined_call_operand.<no memory space> [shape: f32[1,1], index: 8, kind: input, shape index: {}]
  %s9 = inlined_call_operand.hbm [shape: f32[1,1,128], index: 9, kind: output, shape index: {}]
  %s10 = sld [smem:[#allocation0]]
  $region46: #{tpu_custom_call.1} parent=0
    _
  %s12 = ssub.s32 1, %s10
  %s13 = scalar_select 0, %s12, %s10
  %v14 = vstv %s8
  %15 = vst [vmem:[#allocation2] sm:$0x1] %v14
  $region1: #{tpu_custom_call.1} parent=0
    #allocation3 [shape = 'u8[512]{0}', space=vmem, size = 0x400, scoped, tag = 'output window, operand 0, single buffered']
    #allocation4 [shape = 's32[1]{0}', space=sflag, size = 0x4, scoped, tag = 'scoped memory for tpu_custom_call.1']
    %16 = vsyncpa [#allocation4], 0
    // Predicated region
    $region2: #{tpu_custom_call.1} parent=1 // pred_check
      _
    $region3: #{tpu_custom_call.1} parent=1 // pred_check_branch
      %18 = sbr.rel (0) target = $region5
    $region4: #{tpu_custom_call.1} parent=1 // pred_region
      _
    $region5: #{tpu_custom_call.1} parent=1 // pred_fallthru
      _
    // Predicated region
    $region6: #{tpu_custom_call.1} parent=1 // pred_check
      _
    $region7: #{tpu_custom_call.1} parent=1 // pred_check_branch
      %20 = sbr.rel (0) target = $region9
    $region8: #{tpu_custom_call.1} parent=1 // pred_region
      _
    $region9: #{tpu_custom_call.1} parent=1 // pred_fallthru
      _
    // Predicated region
    $region10: #{tpu_custom_call.1} parent=1 // pred_check
      _
    $region11: #{tpu_custom_call.1} parent=1 // pred_check_branch
      %22 = sbr.rel (0) target = $region13
    $region12: #{tpu_custom_call.1} parent=1 // pred_region
      _
    $region13: #{tpu_custom_call.1} parent=1 // pred_fallthru
      _
    // Predicated region
    $region14: #{tpu_custom_call.1} parent=1 // pred_check
      _
    $region15: #{tpu_custom_call.1} parent=1 // pred_check_branch
      %24 = sbr.rel (0) target = $region17
    $region16: #{tpu_custom_call.1} parent=1 // pred_region
      _
    $region17: #{tpu_custom_call.1} parent=1 // pred_fallthru
      _
    // Predicated region
    $region18: #{tpu_custom_call.1} parent=1 // pred_check
      _
    $region19: #{tpu_custom_call.1} parent=1 // pred_check_branch
      %26 = sbr.rel (0) target = $region21
    $region20: #{tpu_custom_call.1} parent=1 // pred_region
      _
    $region21: #{tpu_custom_call.1} parent=1 // pred_fallthru
      _
    // Predicated region
    $region22: #{tpu_custom_call.1} parent=1 // pred_check
      _
    $region23: #{tpu_custom_call.1} parent=1 // pred_check_branch
      %28 = sbr.rel (0) target = $region25
    $region24: #{tpu_custom_call.1} parent=1 // pred_region
      _
    $region25: #{tpu_custom_call.1} parent=1 // pred_fallthru
      _
    // Predicated region
    $region26: #{tpu_custom_call.1} parent=1 // pred_check
      _
    $region27: #{tpu_custom_call.1} parent=1 // pred_check_branch
      %30 = sbr.rel (0) target = $region29
    $region28: #{tpu_custom_call.1} parent=1 // pred_region
      _
    $region29: #{tpu_custom_call.1} parent=1 // pred_fallthru
      _
    // Predicated region
    $region30: #{tpu_custom_call.1} parent=1 // pred_check
      _
    $region31: #{tpu_custom_call.1} parent=1 // pred_check_branch
      %32 = sbr.rel (0) target = $region33
    $region32: #{tpu_custom_call.1} parent=1 // pred_region
      _
    $region33: #{tpu_custom_call.1} parent=1 // pred_fallthru
      _
    // Predicated region
    $region34: #{tpu_custom_call.1} parent=1 // pred_check
      _
    $region35: #{tpu_custom_call.1} parent=1 // pred_check_branch
      %34 = sbr.rel (0) target = $region37
    $region36: #{tpu_custom_call.1} parent=1 // pred_region
      _
    $region37: #{tpu_custom_call.1} parent=1 // pred_fallthru
      _
    %v36 = vld [vmem:[%s0] sm:$0xf]
    %v37 = vld [vmem:[%s0 + $0x4] sm:$0xf]
    %v38 = vld [vmem:[%s0 + $0x8] sm:$0xf]
    %v39 = vld [vmem:[%s0 + $0xc] sm:$0xf]
    %v40 = vld [vmem:[%s1] sm:$0xf]
    %v41 = vld [vmem:[%s1 + $0x4] sm:$0xf]
    %v42 = vld [vmem:[%s1 + $0x8] sm:$0xf]
    %v43 = vld [vmem:[%s1 + $0xc] sm:$0xf]
    %v44 = vld [vmem:[%s1 + $0x10] sm:$0xf]
    %v45 = vld [vmem:[%s1 + $0x14] sm:$0xf]
    %v46 = vld [vmem:[%s1 + $0x18] sm:$0xf]
    %v47 = vld [vmem:[%s1 + $0x1c] sm:$0xf]
    %v48 = vld [vmem:[%s1 + $0x20] sm:$0xf]
    %v49 = vld [vmem:[%s1 + $0x24] sm:$0xf]
    %v50 = vld [vmem:[%s1 + $0x28] sm:$0xf]
    %v51 = vld [vmem:[%s1 + $0x2c] sm:$0xf]
    %v52 = vld [vmem:[%s1 + $0x30] sm:$0xf]
    %v53 = vld [vmem:[%s1 + $0x34] sm:$0xf]
    %v54 = vld [vmem:[%s1 + $0x38] sm:$0xf]
    %v55 = vld [vmem:[%s1 + $0x3c] sm:$0xf]
    %v56 = vld [vmem:[%s2] sm:$0xff]
    %v57 = vld [vmem:[%s2 + $0x8] sm:$0xff]
    %v58 = vld [vmem:[%s2 + $0x10] sm:$0xff]
    %v59 = vld [vmem:[%s2 + $0x18] sm:$0xff]
    %v60 = vld [vmem:[%s2 + $0x20] sm:$0xff]
    %v61 = vld [vmem:[%s2 + $0x28] sm:$0xff]
    %v62 = vld [vmem:[%s2 + $0x30] sm:$0xff]
    %v63 = vld [vmem:[%s2 + $0x38] sm:$0xff]
    %v64 = vld [vmem:[%s2 + $0x40] sm:$0xff]
    %v65 = vld [vmem:[%s2 + $0x48] sm:$0xff]
    %v66 = vld [vmem:[%s2 + $0x50] sm:$0xff]
    %v67 = vld [vmem:[%s2 + $0x58] sm:$0xff]
    %v68 = vld [vmem:[%s2 + $0x60] sm:$0xff]
    %v69 = vld [vmem:[%s2 + $0x68] sm:$0xff]
    %v70 = vld [vmem:[%s2 + $0x70] sm:$0xff]
    %v71 = vld [vmem:[%s2 + $0x78] sm:$0xff]
    %73 = vset.pattern.permute.xlu0 0
    %74 = vperm.xlu0 %73, %v56
    %v75 = vpop.permute.xlu0 %74
    %78 = vset.pattern.permute.xlu0 0
    %79 = vperm.xlu0 %78, %v57
    %v80 = vpop.permute.xlu0 %79
    %83 = vset.pattern.permute.xlu0 0
    %84 = vperm.xlu0 %83, %v58
    %v85 = vpop.permute.xlu0 %84
    %88 = vset.pattern.permute.xlu0 0
    %89 = vperm.xlu0 %88, %v59
    %v90 = vpop.permute.xlu0 %89
    %93 = vset.pattern.permute.xlu0 0
    %94 = vperm.xlu0 %93, %v60
    %v95 = vpop.permute.xlu0 %94
    %98 = vset.pattern.permute.xlu0 0
    %99 = vperm.xlu0 %98, %v61
    %v100 = vpop.permute.xlu0 %99
    %103 = vset.pattern.permute.xlu0 0
    %104 = vperm.xlu0 %103, %v62
    %v105 = vpop.permute.xlu0 %104
    %108 = vset.pattern.permute.xlu0 0
    %109 = vperm.xlu0 %108, %v63
    %v110 = vpop.permute.xlu0 %109
    %113 = vset.pattern.permute.xlu0 0
    %114 = vperm.xlu0 %113, %v64
    %v115 = vpop.permute.xlu0 %114
    %118 = vset.pattern.permute.xlu0 0
    %119 = vperm.xlu0 %118, %v65
    %v120 = vpop.permute.xlu0 %119
    %123 = vset.pattern.permute.xlu0 0
    %124 = vperm.xlu0 %123, %v66
    %v125 = vpop.permute.xlu0 %124
    %128 = vset.pattern.permute.xlu0 0
    %129 = vperm.xlu0 %128, %v67
    %v130 = vpop.permute.xlu0 %129
    %133 = vset.pattern.permute.xlu0 0
    %134 = vperm.xlu0 %133, %v68
    %v135 = vpop.permute.xlu0 %134
    %138 = vset.pattern.permute.xlu0 0
    %139 = vperm.xlu0 %138, %v69
    %v140 = vpop.permute.xlu0 %139
    %143 = vset.pattern.permute.xlu0 0
    %144 = vperm.xlu0 %143, %v70
    %v145 = vpop.permute.xlu0 %144
    %148 = vset.pattern.permute.xlu0 0
    %149 = vperm.xlu0 %148, %v71
    %v150 = vpop.permute.xlu0 %149
    %v168 = vunpack.c.l.b16 %v40
    %v169 = vunpack.c.l.b16 %v41
    %v170 = vunpack.c.l.b16 %v42
    %v171 = vunpack.c.l.b16 %v43
    %v172 = vunpack.c.l.b16 %v44
    %v173 = vunpack.c.l.b16 %v45
    %v174 = vunpack.c.l.b16 %v46
    %v175 = vunpack.c.l.b16 %v47
    %v176 = vunpack.c.l.b16 %v48
    %v177 = vunpack.c.l.b16 %v49
    %v178 = vunpack.c.l.b16 %v50
    %v179 = vunpack.c.l.b16 %v51
    %v180 = vunpack.c.l.b16 %v52
    %v181 = vunpack.c.l.b16 %v53
    %v182 = vunpack.c.l.b16 %v54
    %v183 = vunpack.c.l.b16 %v55
    %v184 = vpack.c.b16 %v169, %v168
    %v185 = vpack.c.b16 %v171, %v170
    %v186 = vpack.c.b16 %v173, %v172
    %v187 = vpack.c.b16 %v175, %v174
    %v188 = vpack.c.b16 %v177, %v176
    %v189 = vpack.c.b16 %v179, %v178
    %v190 = vpack.c.b16 %v181, %v180
    %v191 = vpack.c.b16 %v183, %v182
    %v196 = vunpack.c.l.b16 %v36
    %v197 = vunpack.c.l.b16 %v37
    %v198 = vunpack.c.l.b16 %v38
    %v199 = vunpack.c.l.b16 %v39
    %v200 = vpack.c.b16 %v197, %v196
    %v201 = vpack.c.b16 %v199, %v198
    %vm204 = vcmask 261120
    %v206 = vsel %vm204, %v184, 0
    %v209 = vsel %vm204, %v185, 0
    %v212 = vsel %vm204, %v186, 0
    %v215 = vsel %vm204, %v187, 0
    %v218 = vsel %vm204, %v188, 0
    %v221 = vsel %vm204, %v189, 0
    %v224 = vsel %vm204, %v190, 0
    %v227 = vsel %vm204, %v191, 0
    %229 = vmatprep.subr.bf16.mxu0 0
    %230 = vmatpush1.bf16.msra.mxu0 %v200
    %231 = vmatprep.subr.bf16.mxu0 0
    %232 = vmatpush1.bf16.msra.mxu0 %v201
    %233 = vmatprep.subr.bf16.mxu0 0
    %234 = vmatpush1.bf16.msra.mxu0 0
    %235 = vmatprep.subr.bf16.mxu0 0
    %236 = vmatpush1.bf16.msra.mxu0 0
    %237 = vmatprep.subr.bf16.mxu0 0
    %238 = vmatpush1.bf16.msra.mxu0 0
    %239 = vmatprep.subr.bf16.mxu0 0
    %240 = vmatpush1.bf16.msra.mxu0 0
    %241 = vmatprep.subr.bf16.mxu0 0
    %242 = vmatpush1.bf16.msra.mxu0 0
    %243 = vmatprep.subr.bf16.mxu0 0
    %244 = vmatpush1.bf16.msra.mxu0 0
    %245 = vmatprep.subr.bf16.mxu0 0
    %246 = vmatpush1.bf16.msra.mxu0 0
    %247 = vmatprep.subr.bf16.mxu0 0
    %248 = vmatpush1.bf16.msra.mxu0 0
    %249 = vmatprep.subr.bf16.mxu0 0
    %250 = vmatpush1.bf16.msra.mxu0 0
    %251 = vmatprep.subr.bf16.mxu0 0
    %252 = vmatpush1.bf16.msra.mxu0 0
    %253 = vmatprep.subr.bf16.mxu0 0
    %254 = vmatpush1.bf16.msra.mxu0 0
    %255 = vmatprep.subr.bf16.mxu0 0
    %256 = vmatpush1.bf16.msra.mxu0 0
    %257 = vmatprep.subr.bf16.mxu0 0
    %258 = vmatpush1.bf16.msra.mxu0 0
    %259 = vmatprep.subr.bf16.mxu0 0
    %260 = vmatpush1.bf16.msra.mxu0 0
    %261 = vmatprep.mubr.bf16.mxu0 0
    %262 = vmatmul.mubr.bf16.gmra.mrb[0].mxu0 %v206
    %v263 = vpop.f32.mrb[0].mxu0
    %v264 = vadd.f32 %v75, %v263
    %v265 = vpop.f32.mrb[0].mxu0
    %v266 = vpop.f32.mrb[0].mxu0
    %v267 = vadd.f32 %v80, %v266
    %v268 = vpop.f32.mrb[0].mxu0
    %269 = vmatprep.mubr.bf16.mxu0 0
    %270 = vmatmul.mubr.bf16.gmra.mrb[0].mxu0 %v209
    %v271 = vpop.f32.mrb[0].mxu0
    %v272 = vadd.f32 %v85, %v271
    %v273 = vpop.f32.mrb[0].mxu0
    %v274 = vpop.f32.mrb[0].mxu0
    %v275 = vadd.f32 %v90, %v274
    %v276 = vpop.f32.mrb[0].mxu0
    %277 = vmatprep.mubr.bf16.mxu0 0
    %278 = vmatmul.mubr.bf16.gmra.mrb[0].mxu0 %v212
    %v279 = vpop.f32.mrb[0].mxu0
    %v280 = vadd.f32 %v95, %v279
    %v281 = vpop.f32.mrb[0].mxu0
    %v282 = vpop.f32.mrb[0].mxu0
    %v283 = vadd.f32 %v100, %v282
    %v284 = vpop.f32.mrb[0].mxu0
    %285 = vmatprep.mubr.bf16.mxu0 0
    %286 = vmatmul.mubr.bf16.gmra.mrb[0].mxu0 %v215
    %v287 = vpop.f32.mrb[0].mxu0
    %v288 = vadd.f32 %v105, %v287
    %v289 = vpop.f32.mrb[0].mxu0
    %v290 = vpop.f32.mrb[0].mxu0
    %v291 = vadd.f32 %v110, %v290
    %v292 = vpop.f32.mrb[0].mxu0
    %293 = vmatprep.mubr.bf16.mxu0 0
    %294 = vmatmul.mubr.bf16.gmra.mrb[0].mxu0 %v218
    %v295 = vpop.f32.mrb[0].mxu0
    %v296 = vadd.f32 %v115, %v295
    %v297 = vpop.f32.mrb[0].mxu0
    %v298 = vpop.f32.mrb[0].mxu0
    %v299 = vadd.f32 %v120, %v298
    %v300 = vpop.f32.mrb[0].mxu0
    %301 = vmatprep.mubr.bf16.mxu0 0
    %302 = vmatmul.mubr.bf16.gmra.mrb[0].mxu0 %v221
    %v303 = vpop.f32.mrb[0].mxu0
    %v304 = vadd.f32 %v125, %v303
    %v305 = vpop.f32.mrb[0].mxu0
    %v306 = vpop.f32.mrb[0].mxu0
    %v307 = vadd.f32 %v130, %v306
    %v308 = vpop.f32.mrb[0].mxu0
    %309 = vmatprep.mubr.bf16.mxu0 0
    %310 = vmatmul.mubr.bf16.gmra.mrb[0].mxu0 %v224
    %v311 = vpop.f32.mrb[0].mxu0
    %v312 = vadd.f32 %v135, %v311
    %v313 = vpop.f32.mrb[0].mxu0
    %v314 = vpop.f32.mrb[0].mxu0
    %v315 = vadd.f32 %v140, %v314
    %v316 = vpop.f32.mrb[0].mxu0
    %317 = vmatprep.mubr.bf16.mxu0 0
    %318 = vmatmul.mubr.bf16.gmra.mrb[0].mxu0 %v227
    %v319 = vpop.f32.mrb[0].mxu0
    %v320 = vadd.f32 %v145, %v319
    %v321 = vpop.f32.mrb[0].mxu0
    %v322 = vpop.f32.mrb[0].mxu0
    %v323 = vadd.f32 %v150, %v322
    %v324 = vpop.f32.mrb[0].mxu0
    %325 = vdwg.mxu0
    %v326 = vmax.f32 %v264, 0.0
    %v327 = vmax.f32 %v267, 0.0
    %v328 = vmax.f32 %v272, 0.0
    %v329 = vmax.f32 %v275, 0.0
    %v330 = vmax.f32 %v280, 0.0
    %v331 = vmax.f32 %v283, 0.0
    %v332 = vmax.f32 %v288, 0.0
    %v333 = vmax.f32 %v291, 0.0
    %v334 = vmax.f32 %v296, 0.0
    %v335 = vmax.f32 %v299, 0.0
    %v336 = vmax.f32 %v304, 0.0
    %v337 = vmax.f32 %v307, 0.0
    %v338 = vmax.f32 %v312, 0.0
    %v339 = vmax.f32 %v315, 0.0
    %v340 = vmax.f32 %v320, 0.0
    %v341 = vmax.f32 %v323, 0.0
    %v342 = vpack.c.bf16 %v327, %v326
    %v343 = vpack.c.bf16 %v329, %v328
    %v344 = vpack.c.bf16 %v331, %v330
    %v345 = vpack.c.bf16 %v333, %v332
    %v346 = vpack.c.bf16 %v335, %v334
    %v347 = vpack.c.bf16 %v337, %v336
    %v348 = vpack.c.bf16 %v339, %v338
    %v349 = vpack.c.bf16 %v341, %v340
    %v350 = vld [vmem:[%s3] sm:$0xf]
    %v351 = vld [vmem:[%s3 + $0x4] sm:$0xf]
    %v352 = vld [vmem:[%s3 + $0x8] sm:$0xf]
    %v353 = vld [vmem:[%s3 + $0xc] sm:$0xf]
    %v354 = vld [vmem:[%s3 + $0x10] sm:$0xf]
    %v355 = vld [vmem:[%s3 + $0x14] sm:$0xf]
    %v356 = vld [vmem:[%s3 + $0x18] sm:$0xf]
    %v357 = vld [vmem:[%s3 + $0x1c] sm:$0xf]
    %v358 = vld [vmem:[%s4] sm:$0xff]
    %v359 = vld [vmem:[%s4 + $0x8] sm:$0xff]
    %v360 = vld [vmem:[%s4 + $0x10] sm:$0xff]
    %v361 = vld [vmem:[%s4 + $0x18] sm:$0xff]
    %v362 = vld [vmem:[%s4 + $0x20] sm:$0xff]
    %v363 = vld [vmem:[%s4 + $0x28] sm:$0xff]
    %v364 = vld [vmem:[%s4 + $0x30] sm:$0xff]
    %v365 = vld [vmem:[%s4 + $0x38] sm:$0xff]
    %367 = vset.pattern.permute.xlu0 0
    %368 = vperm.xlu0 %367, %v358
    %v369 = vpop.permute.xlu0 %368
    %372 = vset.pattern.permute.xlu0 0
    %373 = vperm.xlu0 %372, %v359
    %v374 = vpop.permute.xlu0 %373
    %377 = vset.pattern.permute.xlu0 0
    %378 = vperm.xlu0 %377, %v360
    %v379 = vpop.permute.xlu0 %378
    %382 = vset.pattern.permute.xlu0 0
    %383 = vperm.xlu0 %382, %v361
    %v384 = vpop.permute.xlu0 %383
    %387 = vset.pattern.permute.xlu0 0
    %388 = vperm.xlu0 %387, %v362
    %v389 = vpop.permute.xlu0 %388
    %392 = vset.pattern.permute.xlu0 0
    %393 = vperm.xlu0 %392, %v363
    %v394 = vpop.permute.xlu0 %393
    %397 = vset.pattern.permute.xlu0 0
    %398 = vperm.xlu0 %397, %v364
    %v399 = vpop.permute.xlu0 %398
    %402 = vset.pattern.permute.xlu0 0
    %403 = vperm.xlu0 %402, %v365
    %v404 = vpop.permute.xlu0 %403
    %v414 = vunpack.c.l.b16 %v350
    %v415 = vunpack.c.l.b16 %v351
    %v416 = vunpack.c.l.b16 %v352
    %v417 = vunpack.c.l.b16 %v353
    %v418 = vunpack.c.l.b16 %v354
    %v419 = vunpack.c.l.b16 %v355
    %v420 = vunpack.c.l.b16 %v356
    %v421 = vunpack.c.l.b16 %v357
    %v422 = vpack.c.b16 %v415, %v414
    %v423 = vpack.c.b16 %v417, %v416
    %v424 = vpack.c.b16 %v419, %v418
    %v425 = vpack.c.b16 %v421, %v420
    %430 = vmatprep.subr.bf16.mxu0 0
    %431 = vmatpush1.bf16.msra.mxu0 %v342
    %432 = vmatprep.subr.bf16.mxu0 0
    %433 = vmatpush1.bf16.msra.mxu0 %v343
    %434 = vmatprep.subr.bf16.mxu0 0
    %435 = vmatpush1.bf16.msra.mxu0 %v344
    %436 = vmatprep.subr.bf16.mxu0 0
    %437 = vmatpush1.bf16.msra.mxu0 %v345
    %438 = vmatprep.subr.bf16.mxu0 0
    %439 = vmatpush1.bf16.msra.mxu0 %v346
    %440 = vmatprep.subr.bf16.mxu0 0
    %441 = vmatpush1.bf16.msra.mxu0 %v347
    %442 = vmatprep.subr.bf16.mxu0 0
    %443 = vmatpush1.bf16.msra.mxu0 %v348
    %444 = vmatprep.subr.bf16.mxu0 0
    %445 = vmatpush1.bf16.msra.mxu0 %v349
    %446 = vmatprep.subr.bf16.mxu0 0
    %447 = vmatpush1.bf16.msra.mxu0 0
    %448 = vmatprep.subr.bf16.mxu0 0
    %449 = vmatpush1.bf16.msra.mxu0 0
    %450 = vmatprep.subr.bf16.mxu0 0
    %451 = vmatpush1.bf16.msra.mxu0 0
    %452 = vmatprep.subr.bf16.mxu0 0
    %453 = vmatpush1.bf16.msra.mxu0 0
    %454 = vmatprep.subr.bf16.mxu0 0
    %455 = vmatpush1.bf16.msra.mxu0 0
    %456 = vmatprep.subr.bf16.mxu0 0
    %457 = vmatpush1.bf16.msra.mxu0 0
    %458 = vmatprep.subr.bf16.mxu0 0
    %459 = vmatpush1.bf16.msra.mxu0 0
    %460 = vmatprep.subr.bf16.mxu0 0
    %461 = vmatpush1.bf16.msra.mxu0 0
    %462 = vmatprep.mubr.bf16.mxu0 0
    %463 = vmatmul.mubr.bf16.gmra.mrb[0].mxu0 %v422
    %v464 = vpop.f32.mrb[0].mxu0
    %v465 = vadd.f32 %v369, %v464
    %v466 = vpop.f32.mrb[0].mxu0
    %v467 = vpop.f32.mrb[0].mxu0
    %v468 = vadd.f32 %v374, %v467
    %v469 = vpop.f32.mrb[0].mxu0
    %470 = vmatprep.mubr.bf16.mxu0 0
    %471 = vmatmul.mubr.bf16.gmra.mrb[0].mxu0 %v423
    %v472 = vpop.f32.mrb[0].mxu0
    %v473 = vadd.f32 %v379, %v472
    %v474 = vpop.f32.mrb[0].mxu0
    %v475 = vpop.f32.mrb[0].mxu0
    %v476 = vadd.f32 %v384, %v475
    %v477 = vpop.f32.mrb[0].mxu0
    %478 = vmatprep.mubr.bf16.mxu0 0
    %479 = vmatmul.mubr.bf16.gmra.mrb[0].mxu0 %v424
    %v480 = vpop.f32.mrb[0].mxu0
    %v481 = vadd.f32 %v389, %v480
    %v482 = vpop.f32.mrb[0].mxu0
    %v483 = vpop.f32.mrb[0].mxu0
    %v484 = vadd.f32 %v394, %v483
    %v485 = vpop.f32.mrb[0].mxu0
    %486 = vmatprep.mubr.bf16.mxu0 0
    %487 = vmatmul.mubr.bf16.gmra.mrb[0].mxu0 %v425
    %v488 = vpop.f32.mrb[0].mxu0
    %v489 = vadd.f32 %v399, %v488
    %v490 = vpop.f32.mrb[0].mxu0
    %v491 = vpop.f32.mrb[0].mxu0
    %v492 = vadd.f32 %v404, %v491
    %v493 = vpop.f32.mrb[0].mxu0
    %494 = vdwg.mxu0
    %v495 = vmax.f32 %v465, 0.0
    %v496 = vmax.f32 %v468, 0.0
    %v497 = vmax.f32 %v473, 0.0
    %v498 = vmax.f32 %v476, 0.0
    %v499 = vmax.f32 %v481, 0.0
    %v500 = vmax.f32 %v484, 0.0
    %v501 = vmax.f32 %v489, 0.0
    %v502 = vmax.f32 %v492, 0.0
    %v503 = vpack.c.bf16 %v496, %v495
    %v504 = vpack.c.bf16 %v498, %v497
    %v505 = vpack.c.bf16 %v500, %v499
    %v506 = vpack.c.bf16 %v502, %v501
    %v507 = vld [vmem:[%s5] sm:$0xf]
    %v508 = vld [vmem:[%s5 + $0x4] sm:$0xf]
    %v509 = vld [vmem:[%s5 + $0x8] sm:$0xf]
    %v510 = vld [vmem:[%s5 + $0xc] sm:$0xf]
    %v511 = vld [vmem:[%s6] sm:$0xff]
    %v512 = vld [vmem:[%s6 + $0x8] sm:$0xff]
    %v513 = vld [vmem:[%s6 + $0x10] sm:$0xff]
    %v514 = vld [vmem:[%s6 + $0x18] sm:$0xff]
    %516 = vset.pattern.permute.xlu0 0
    %517 = vperm.xlu0 %516, %v511
    %v518 = vpop.permute.xlu0 %517
    %521 = vset.pattern.permute.xlu0 0
    %522 = vperm.xlu0 %521, %v512
    %v523 = vpop.permute.xlu0 %522
    %526 = vset.pattern.permute.xlu0 0
    %527 = vperm.xlu0 %526, %v513
    %v528 = vpop.permute.xlu0 %527
    %531 = vset.pattern.permute.xlu0 0
    %532 = vperm.xlu0 %531, %v514
    %v533 = vpop.permute.xlu0 %532
    %v539 = vunpack.c.l.b16 %v507
    %v540 = vunpack.c.l.b16 %v508
    %v541 = vunpack.c.l.b16 %v509
    %v542 = vunpack.c.l.b16 %v510
    %v543 = vpack.c.b16 %v540, %v539
    %v544 = vpack.c.b16 %v542, %v541
    %vm545 = vcmask 523264
    %v547 = vsel %vm545, %v543, 0
    %v550 = vsel %vm545, %v544, 0
    %552 = vmatprep.subr.bf16.mxu0 0
    %553 = vmatpush1.bf16.msra.mxu0 %v503
    %554 = vmatprep.subr.bf16.mxu0 0
    %555 = vmatpush1.bf16.msra.mxu0 %v504
    %556 = vmatprep.subr.bf16.mxu0 0
    %557 = vmatpush1.bf16.msra.mxu0 %v505
    %558 = vmatprep.subr.bf16.mxu0 0
    %559 = vmatpush1.bf16.msra.mxu0 %v506
    %560 = vmatprep.subr.bf16.mxu0 0
    %561 = vmatpush1.bf16.msra.mxu0 0
    %562 = vmatprep.subr.bf16.mxu0 0
    %563 = vmatpush1.bf16.msra.mxu0 0
    %564 = vmatprep.subr.bf16.mxu0 0
    %565 = vmatpush1.bf16.msra.mxu0 0
    %566 = vmatprep.subr.bf16.mxu0 0
    %567 = vmatpush1.bf16.msra.mxu0 0
    %568 = vmatprep.subr.bf16.mxu0 0
    %569 = vmatpush1.bf16.msra.mxu0 0
    %570 = vmatprep.subr.bf16.mxu0 0
    %571 = vmatpush1.bf16.msra.mxu0 0
    %572 = vmatprep.subr.bf16.mxu0 0
    %573 = vmatpush1.bf16.msra.mxu0 0
    %574 = vmatprep.subr.bf16.mxu0 0
    %575 = vmatpush1.bf16.msra.mxu0 0
    %576 = vmatprep.subr.bf16.mxu0 0
    %577 = vmatpush1.bf16.msra.mxu0 0
    %578 = vmatprep.subr.bf16.mxu0 0
    %579 = vmatpush1.bf16.msra.mxu0 0
    %580 = vmatprep.subr.bf16.mxu0 0
    %581 = vmatpush1.bf16.msra.mxu0 0
    %582 = vmatprep.subr.bf16.mxu0 0
    %583 = vmatpush1.bf16.msra.mxu0 0
    %584 = vmatprep.mubr.bf16.mxu0 0
    %585 = vmatmul.mubr.bf16.gmra.mrb[0].mxu0 %v547
    %v586 = vpop.f32.mrb[0].mxu0
    %v587 = vadd.f32 %v518, %v586
    %v588 = vpop.f32.mrb[0].mxu0
    %v589 = vpop.f32.mrb[0].mxu0
    %v590 = vadd.f32 %v523, %v589
    %v591 = vpop.f32.mrb[0].mxu0
    %592 = vmatprep.mubr.bf16.mxu0 0
    %593 = vmatmul.mubr.bf16.gmra.mrb[0].mxu0 %v550
    %v594 = vpop.f32.mrb[0].mxu0
    %v595 = vadd.f32 %v528, %v594
    %v596 = vpop.f32.mrb[0].mxu0
    %v597 = vpop.f32.mrb[0].mxu0
    %v598 = vadd.f32 %v533, %v597
    %v599 = vpop.f32.mrb[0].mxu0
    %600 = vdwg.mxu0
    %v601 = vmax.f32 %v587, 0.0
    %v602 = vmax.f32 %v590, 0.0
    %v603 = vmax.f32 %v595, 0.0
    %v604 = vmax.f32 %v598, 0.0
    %v605 = vpack.c.bf16 %v602, %v601
    %v606 = vpack.c.bf16 %v604, %v603
    %v607 = vld [vmem:[%s7] sm:$0x1]
    %v608 = vld [vmem:[#allocation2] sm:$0x1]
    %610 = vset.pattern.permute.xlu0 0
    %611 = vperm.xlu0 %610, %v608
    %v612 = vpop.permute.xlu0 %611
    %v614 = vlaneseq
    %v615 = vshrl.u32 %v614, 7
    %v616 = vsub.s32 0, %v615
    %v617 = vrot.slane %v612, %v616
    %v619 = vsel %vm204, %v607, 0
    %621 = vmatprep.subr.bf16.mxu0 0
    %622 = vmatpush1.bf16.msra.mxu0 %v605
    %623 = vmatprep.subr.bf16.mxu0 0
    %624 = vmatpush1.bf16.msra.mxu0 %v606
    %625 = vmatprep.subr.bf16.mxu0 0
    %626 = vmatpush1.bf16.msra.mxu0 0
    %627 = vmatprep.subr.bf16.mxu0 0
    %628 = vmatpush1.bf16.msra.mxu0 0
    %629 = vmatprep.subr.bf16.mxu0 0
    %630 = vmatpush1.bf16.msra.mxu0 0
    %631 = vmatprep.subr.bf16.mxu0 0
    %632 = vmatpush1.bf16.msra.mxu0 0
    %633 = vmatprep.subr.bf16.mxu0 0
    %634 = vmatpush1.bf16.msra.mxu0 0
    %635 = vmatprep.subr.bf16.mxu0 0
    %636 = vmatpush1.bf16.msra.mxu0 0
    %637 = vmatprep.subr.bf16.mxu0 0
    %638 = vmatpush1.bf16.msra.mxu0 0
    %639 = vmatprep.subr.bf16.mxu0 0
    %640 = vmatpush1.bf16.msra.mxu0 0
    %641 = vmatprep.subr.bf16.mxu0 0
    %642 = vmatpush1.bf16.msra.mxu0 0
    %643 = vmatprep.subr.bf16.mxu0 0
    %644 = vmatpush1.bf16.msra.mxu0 0
    %645 = vmatprep.subr.bf16.mxu0 0
    %646 = vmatpush1.bf16.msra.mxu0 0
    %647 = vmatprep.subr.bf16.mxu0 0
    %648 = vmatpush1.bf16.msra.mxu0 0
    %649 = vmatprep.subr.bf16.mxu0 0
    %650 = vmatpush1.bf16.msra.mxu0 0
    %651 = vmatprep.subr.bf16.mxu0 0
    %652 = vmatpush1.bf16.msra.mxu0 0
    %653 = vmatprep.mubr.bf16.mxu0 0
    %654 = vmatmul.mubr.bf16.gmra.mrb[0].mxu0 %v619
    %v655 = vpop.f32.mrb[0].mxu0
    %v656 = vadd.f32 %v617, %v655
    %v657 = vpop.f32.mrb[0].mxu0
    %v658 = vpop.f32.mrb[0].mxu0
    %v659 = vpop.f32.mrb[0].mxu0
    %660 = vdwg.mxu0
    %661 = vst [vmem:[#allocation3] sm:$0x1] %v656
    // Predicated region
    $region38: #{tpu_custom_call.1} parent=1 // pred_check
      _
    $region39: #{tpu_custom_call.1} parent=1 // pred_check_branch
      %663 = sbr.rel (0) target = $region41
    $region40: #{tpu_custom_call.1} parent=1 // pred_region
      %s665 = ssub.s32 16, 16
      %666 = vsyncadd [#allocation4], %s665
      %s668 = sshll.u32 [#allocation3], 4
      %s669 = int_to_ptr.vmem [resolvable:$true] %s668
      %671 = dma.vmem_to_hbm [thread:$0]  %s669, 16, %s9, [#allocation4]
    $region41: #{tpu_custom_call.1} parent=1 // pred_fallthru
      _
    // Predicated region
    $region42: #{tpu_custom_call.1} parent=1 // pred_check
      _
    $region43: #{tpu_custom_call.1} parent=1 // pred_check_branch
      %673 = sbr.rel (0) target = $region45
    $region44: #{tpu_custom_call.1} parent=1 // pred_region
      %674 = dma.done [#allocation4], 16
    $region45: #{tpu_custom_call.1} parent=1 // pred_fallthru
      _
    %675 = vsyncpa [#allocation4], 1

</llo_original>
